<compile_context>
chip_gen: v7x
topology: tpu7x:2x2x1
jax: 0.10.0
libtpu: 0.0.40
codegen_flags: <defaults>
</compile_context>

<pallas_src>
import math

import jax
import jax.numpy as jnp
from jax.experimental import pallas as pl
from jax.experimental.pallas import tpu as pltpu

_GELU_C = math.sqrt(2.0 / math.pi)


def _gelu_kernel(x_ref, o_ref):
    # Elementwise tanh-approx GELU on one (tm, lanes) tile.
    x = x_ref[...].astype(jnp.float32)
    x3 = x * x * x                         # explicit VALU multiplies, not pow
    inner = _GELU_C * (x + 0.044715 * x3)
    y = 0.5 * x * (1.0 + jnp.tanh(inner))  # tanh -> EUP slot
    o_ref[...] = y.astype(o_ref.dtype)


def _sublane_multiple(dtype) -> int:
    # Native packed sublane tile: 8 for 4-byte, 16 for 2-byte, 32 for 1-byte.
    return max(8, 32 // jnp.dtype(dtype).itemsize)


def _tile_bytes_budget() -> int:
    # Per-block byte budget; double-buffered in+out keeps ~4x this in flight.
    try:
        kind = jax.devices()[0].device_kind.lower()
    except Exception:  # pragma: no cover - defensive
        kind = ""
    if any(v in kind for v in ("v2", "v3", "v4", "v5")):
        return 2 * 1024 * 1024   # 16 MiB default scoped VMEM -> ~8 MiB in flight
    return 4 * 1024 * 1024       # v6e / v7x: 32 MiB scoped -> ~16 MiB in flight


def _round_up(a: int, m: int) -> int:
    return ((a + m - 1) // m) * m


def _pick_tm(rows: int, lanes: int, itemsize: int, sublane: int) -> int:
    """Row-tile size: multiple of the dtype sublane tile (or == rows), capped
    by the per-chip VMEM budget, and chosen so grid_m >= 2 whenever rows can
    be split (keeps both v7x TensorCores busy via the "parallel" axis)."""
    max_rows = _tile_bytes_budget() // max(lanes * itemsize, 1)
    max_rows = max(sublane, (max_rows // sublane) * sublane)
    if rows <= sublane:
        return rows  # single block spanning the full row dim (allowed)
    tm = min(max_rows, _round_up(pl.cdiv(rows, 2), sublane))
    return max(tm, sublane)


def gelu(x):
    """Tanh-approximation GELU, identical to the PyTorch reference `gelu`.

    Any shape / dtype. The wrapper presents a lane-dense (rows, lanes) 2-D
    view with as few data copies as possible, runs a row-tiled elementwise
    Pallas kernel, and reshapes back.
    """
    orig_shape = x.shape
    dtype = x.dtype
    n = x.size
    if n == 0:
        return x

    itemsize = jnp.dtype(dtype).itemsize
    sublane = _sublane_multiple(dtype)
    budget = _tile_bytes_budget()

    pad_tail = 0
    if (x.ndim >= 2
            and x.shape[-1] % 128 == 0
            and x.shape[-1] * sublane * itemsize <= budget):
        # Fast path A: last dim is already lane-aligned; collapse leading dims.
        lanes = x.shape[-1]
        rows = n // lanes
        x2d = x.reshape(rows, lanes)
    else:
        # Fast path B: flatten and pick the widest lane count dividing n.
        flat = x.reshape(-1)
        lanes = None
        for cand in (1024, 512, 256, 128):
            if n % cand == 0:
                lanes = cand
                break
        if lanes is None:
            # Ragged size: pad only the flat tail (gelu(0) == 0). Rare.
            # TODO(synk): handle this tail fully in-kernel to avoid pad/slice.
            lanes = 128
            pad_tail = _round_up(n, lanes) - n
            flat = jnp.pad(flat, (0, pad_tail))
        rows = (n + pad_tail) // lanes
        x2d = flat.reshape(rows, lanes)

    tm = _pick_tm(rows, lanes, itemsize, sublane)
    grid_m = pl.cdiv(rows, tm)   # partial last block handled by the pipeline

    out2d = pl.pallas_call(
        _gelu_kernel,
        out_shape=jax.ShapeDtypeStruct((rows, lanes), dtype),
        grid=(grid_m,),
        in_specs=[pl.BlockSpec((tm, lanes), lambda i: (i, 0))],
        out_specs=pl.BlockSpec((tm, lanes), lambda i: (i, 0)),
        compiler_params=pltpu.CompilerParams(
            dimension_semantics=("parallel",)),
        cost_estimate=pl.CostEstimate(
            flops=8 * n,
            transcendentals=n,
            bytes_accessed=2 * n * itemsize),
    )(x2d)

    if pad_tail:
        return out2d.reshape(-1)[:n].reshape(orig_shape)
    return out2d.reshape(orig_shape)


def _gelu_ref(x):
    # Pure-JAX reference (same tanh approximation) for correctness checking.
    xf = x.astype(jnp.float32)
    return (0.5 * xf * (1.0 + jnp.tanh(_GELU_C * (xf + 0.044715 * xf ** 3)))
            ).astype(x.dtype)


if __name__ == "__main__":
    key = jax.random.PRNGKey(0)
    k1, k2, k3 = jax.random.split(key, 3)

    # Primary shape from the module's usage (elementwise, any shape works).
    x1 = jax.random.normal(k1, (2, 4, 16, 16), jnp.float32)   # path B, grid=1
    x2 = jax.random.normal(k2, (24, 256), jnp.float32)        # path A, grid=2 (partial last block)
    x3 = jax.random.normal(k3, (7, 5), jnp.float32)           # ragged fallback path

    for x in (x1, x2, x3):
        out = gelu(x)
        jax.block_until_ready(out)
        ref = _gelu_ref(x)
        assert out.shape == x.shape
        assert jnp.allclose(out, ref, atol=1e-5, rtol=1e-5)

    print("KERNEL_OK")
</pallas_src>

<mosaic_0001>
module attributes {stable_mosaic.version = 11 : i64} {
  func.func @_gelu_kernel(%arg0: i32, %arg1: memref<2x1024xf32, #tpu.memory_space<vmem>>, %arg2: memref<2x1024xf32, #tpu.memory_space<vmem>>) attributes {dimension_semantics = [#tpu.dimension_semantics<parallel>], iteration_bounds = array<i64: 1>, scalar_prefetch = 0 : i64, scratch_operands = 0 : i64, tpu.core_type = #tpu.core_type<tc>, window_params = [{transform_indices = @transform_0, window_bounds = array<i64: 2, 1024>}, {transform_indices = @transform_1, window_bounds = array<i64: 2, 1024>}]} {
    %c0 = arith.constant 0 : index
    %c0_0 = arith.constant 0 : index
    %0 = vector.load %arg1[%c0, %c0_0] : memref<2x1024xf32, #tpu.memory_space<vmem>>, vector<2x1024xf32>
    %1 = arith.mulf %0, %0 : vector<2x1024xf32>
    %2 = arith.mulf %1, %0 : vector<2x1024xf32>
    %cst = arith.constant 4.471500e-02 : f32
    %3 = vector.broadcast %cst : f32 to vector<2x1024xf32>
    %4 = arith.mulf %3, %2 : vector<2x1024xf32>
    %5 = arith.addf %0, %4 : vector<2x1024xf32>
    %cst_1 = arith.constant 0.797884583 : f32
    %6 = vector.broadcast %cst_1 : f32 to vector<2x1024xf32>
    %7 = arith.mulf %6, %5 : vector<2x1024xf32>
    %cst_2 = arith.constant 5.000000e-01 : f32
    %8 = vector.broadcast %cst_2 : f32 to vector<2x1024xf32>
    %9 = arith.mulf %8, %0 : vector<2x1024xf32>
    %10 = math.tanh %7 : vector<2x1024xf32>
    %cst_3 = arith.constant 1.000000e+00 : f32
    %11 = vector.broadcast %cst_3 : f32 to vector<2x1024xf32>
    %12 = arith.addf %11, %10 : vector<2x1024xf32>
    %13 = arith.mulf %9, %12 : vector<2x1024xf32>
    %c0_4 = arith.constant 0 : index
    %c0_5 = arith.constant 0 : index
    %14 = vector.load %arg2[%c0_4, %c0_5] : memref<2x1024xf32, #tpu.memory_space<vmem>>, vector<2x1024xf32>
    tpu.vector_store %arg2[%c0_4, %c0_5], %13 {strides = array<i32>} : memref<2x1024xf32, #tpu.memory_space<vmem>>, vector<2x1024xf32>,
    return
  }
  func.func @transform_0(%arg0: i32) -> (i32, i32) {
    %c0_i32 = arith.constant 0 : i32
    %c0_i32_0 = arith.constant 0 : i32
    return %arg0, %c0_i32 : i32, i32
  }
  func.func @transform_1(%arg0: i32) -> (i32, i32) {
    %c0_i32 = arith.constant 0 : i32
    %c0_i32_0 = arith.constant 0 : i32
    return %arg0, %c0_i32 : i32, i32
  }
}

</mosaic_0001>

<llo_original>
// kernel: tpu_custom_call.1
$region0: #{tpu_custom_call.1}
  #allocation0 [shape = 'u32[]', space=smem, size = 0x4, offset = 0x4, fixed_abs, tag = 'smem constant byte address 0x4 - core index']
  #allocation1 [shape = 'u32[144,128]{1,0:T(1,128)}', space=vmem, size = 0x12000, scoped, tag = 'internal scratch']
  %s0 = inlined_call_operand.hbm [shape: f32[2,1024], index: 0, kind: input, shape index: {}]
  %s1 = inlined_call_operand.hbm [shape: f32[2,1024], index: 1, kind: output, shape index: {}]
  %s2 = sld [smem:[#allocation0]]
  $region18: #{tpu_custom_call.1} parent=0
    _
  %s4 = ssub.s32 1, %s2
  %s5 = scalar_select 0, %s4, %s2
  $region1: #{tpu_custom_call.1} parent=0
    #allocation2 [shape = 'u8[8192]{0}', space=vmem, size = 0x2000, scoped, tag = 'input window, operand 0, single buffered']
    #allocation3 [shape = 's32[1]{0}', space=sflag, size = 0x4, scoped, tag = 'scoped memory for tpu_custom_call.1']
    #allocation4 [shape = 's32[1]{0}', space=sflag, size = 0x4, scoped, tag = 'scoped memory for tpu_custom_call.1']
    #allocation5 [shape = 'u8[8192]{0}', space=vmem, size = 0x2000, scoped, tag = 'output window, operand 0, single buffered']
    %6 = vsyncpa [#allocation3], 0
    %7 = vsyncpa [#allocation4], 0
    // Predicated region
    $region2: #{tpu_custom_call.1} parent=1 // pred_check
      _
    $region3: #{tpu_custom_call.1} parent=1 // pred_check_branch
      %9 = sbr.rel (0) target = $region5
    $region4: #{tpu_custom_call.1} parent=1 // pred_region
      %s11 = ssub.s32 256, 256
      %12 = vsyncadd [#allocation3], %s11
      %s14 = sshll.u32 [#allocation2], 4
      %s15 = int_to_ptr.vmem [resolvable:$true] %s14
      %17 = dma.hbm_to_vmem [thread:$0]  %s0, 256, %s15, [#allocation3]
    $region5: #{tpu_custom_call.1} parent=1 // pred_fallthru
      _
    // Predicated region
    $region6: #{tpu_custom_call.1} parent=1 // pred_check
      _
    $region7: #{tpu_custom_call.1} parent=1 // pred_check_branch
      %19 = sbr.rel (0) target = $region9
    $region8: #{tpu_custom_call.1} parent=1 // pred_region
      %20 = dma.done [#allocation3], 256
    $region9: #{tpu_custom_call.1} parent=1 // pred_fallthru
      _
    %v21 = vld [vmem:[#allocation2] sm:$0xff]
    %v22 = vld [vmem:[#allocation2 + $0x8] sm:$0xff]
    %v23 = vmul.f32 %v21, %v21
    %v24 = vmul.f32 %v22, %v22
    %v25 = vmul.f32 %v23, %v21
    %v26 = vmul.f32 %v24, %v22
    %v27 = vmul.f32 %v25, 0.044715
    %v28 = vmul.f32 %v26, 0.044715
    %v29 = vadd.f32 %v21, %v27
    %v30 = vadd.f32 %v22, %v28
    %v31 = vmul.f32 %v29, 0.7978846
    %v32 = vmul.f32 %v30, 0.7978846
    %v33 = vmul.f32 %v21, 0.5
    %v34 = vmul.f32 %v22, 0.5
    %v35 = vtanh.pop %v31
    %v36 = vtanh.pop %v32
    %v37 = vadd.f32 %v35, 1.0
    %v38 = vadd.f32 %v36, 1.0
    %v39 = vmul.f32 %v33, %v37
    %v40 = vmul.f32 %v34, %v38
    %41 = vst [vmem:[#allocation5] sm:$0xff] %v39
    %42 = vst [vmem:[#allocation5 + $0x8] sm:$0xff] %v40
    // Predicated region
    $region10: #{tpu_custom_call.1} parent=1 // pred_check
      _
    $region11: #{tpu_custom_call.1} parent=1 // pred_check_branch
      %44 = sbr.rel (0) target = $region13
    $region12: #{tpu_custom_call.1} parent=1 // pred_region
      %s46 = ssub.s32 256, 256
      %47 = vsyncadd [#allocation4], %s46
      %s49 = sshll.u32 [#allocation5], 4
      %s50 = int_to_ptr.vmem [resolvable:$true] %s49
      %52 = dma.vmem_to_hbm [thread:$0]  %s50, 256, %s1, [#allocation4]
    $region13: #{tpu_custom_call.1} parent=1 // pred_fallthru
      _
    // Predicated region
    $region14: #{tpu_custom_call.1} parent=1 // pred_check
      _
    $region15: #{tpu_custom_call.1} parent=1 // pred_check_branch
      %54 = sbr.rel (0) target = $region17
    $region16: #{tpu_custom_call.1} parent=1 // pred_region
      %55 = dma.done [#allocation4], 256
    $region17: #{tpu_custom_call.1} parent=1 // pred_fallthru
      _
    %56 = vsyncpa [#allocation3], 1
    %57 = vsyncpa [#allocation4], 1

</llo_original>
